<compile_context>
chip_gen: v7x
topology: tpu7x:2x2x1
jax: 0.10.0
libtpu: 0.0.40
codegen_flags: <defaults>
</compile_context>

<pallas_src>
import functools

import jax
import jax.numpy as jnp
from jax.experimental import pallas as pl
from jax.experimental.pallas import tpu as pltpu

_INV_SQRT2 = 0.7071067811865476
_MiB = 1024 * 1024
_SCRATCH_MARGIN = 4 * _MiB  # Mosaic internal scratch headroom


def _gelu_exact(h):
    # Exact GELU: 0.5 * h * (1 + erf(h / sqrt(2)))  (erf uses the EUP/VPU).
    return 0.5 * h * (1.0 + jax.lax.erf(h * _INV_SQRT2))


# -----------------------------------------------------------------------------------
# Kernels
# -----------------------------------------------------------------------------------
def _ffn_resident_kernel(x_ref, w1_ref, w2_ref, o_ref, *scratch, tf, nk):
    """Weight-resident path: W1^T/W2^T live fully in VMEM (fetched from HBM once).

    x_ref  : (tm, d_model)   native dtype
    w1_ref : (d_model, d_ff) full W1^T
    w2_ref : (d_ff, d_model) full W2^T
    o_ref  : (tm, d_model)
    scratch: optional (tm, d_model) f32 accumulator when nk > 1
    """
    x = x_ref[...]

    if nk == 1:
        h = jnp.dot(x, w1_ref[...], preferred_element_type=jnp.float32)
        h = _gelu_exact(h)
        o_ref[...] = jnp.dot(h.astype(w2_ref.dtype), w2_ref[...],
                             preferred_element_type=jnp.float32).astype(o_ref.dtype)
        return

    acc_ref = scratch[0]
    # Static chunk loop over d_ff (tf is a multiple of 128 when nk > 1): bounds the
    # (tm, tf) GELU intermediate while the weights stay resident.
    for j in range(nk):
        lo, hi = j * tf, (j + 1) * tf
        h = jnp.dot(x, w1_ref[:, lo:hi], preferred_element_type=jnp.float32)
        h = _gelu_exact(h)
        p = jnp.dot(h.astype(w2_ref.dtype), w2_ref[lo:hi, :],
                    preferred_element_type=jnp.float32)
        if j == 0:
            acc_ref[...] = p          # first partial written directly (no zero-fill)
        else:
            acc_ref[...] += p
    o_ref[...] = acc_ref[...].astype(o_ref.dtype)


def _ffn_stream_kernel(x_ref, w1_ref, w2_ref, o_ref, acc_ref):
    """Streaming path: d_ff tiled on the (inner, 'arbitrary') grid axis.

    x_ref  : (tm, d_model)   native dtype
    w1_ref : (d_model, tf)   k-th column block of W1^T
    w2_ref : (tf, d_model)   k-th row block of W2^T
    o_ref  : (tm, d_model)
    acc_ref: (tm, d_model) f32 accumulator, resident across the k (d_ff) axis
    """
    k = pl.program_id(1)

    h = jnp.dot(x_ref[...], w1_ref[...], preferred_element_type=jnp.float32)
    h = _gelu_exact(h)
    p = jnp.dot(h.astype(w2_ref.dtype), w2_ref[...], preferred_element_type=jnp.float32)

    @pl.when(k == 0)
    def _():
        acc_ref[...] = p              # first partial written directly (no zero-fill)

    @pl.when(k > 0)
    def _():
        acc_ref[...] += p

    @pl.when(k == pl.num_programs(1) - 1)
    def _():
        o_ref[...] = acc_ref[...].astype(o_ref.dtype)


# -----------------------------------------------------------------------------------
# Tile / path selection (trace-time Python)
# -----------------------------------------------------------------------------------
def _round_up(x, m):
    return (x + m - 1) // m * m


def _cdiv(a, b):
    return -(-a // b)


def _vmem_budget():
    """Returns (physical_capacity_per_core, 75% budget, is_v7x)."""
    kind = ""
    try:
        kind = jax.devices()[0].device_kind.lower()
    except Exception:
        pass
    is_v7x = "v7" in kind
    cap = 0
    try:
        cap = int(pltpu.get_tpu_info().vmem_capacity_bytes)
    except Exception:
        cap = 0
    if cap <= 0:
        cap = 64 * _MiB if is_v7x else 128 * _MiB
    if is_v7x:
        cap = min(cap, 64 * _MiB)     # per-TensorCore on v7x, never a per-chip reading
    cap = min(cap, 128 * _MiB)
    return cap, (cap * 3) // 4, is_v7x


def _row_tile_candidates(M, is_v7x):
    M8 = _round_up(M, 8)
    if M8 <= 256:
        tm = M8
        if is_v7x and M > 8:
            # >= 2 row blocks so both TensorCores get work on megacore parts.
            tm = min(tm, _round_up(_cdiv(M, 2), 8))
        return [max(tm, 8)]
    if is_v7x:
        cap = _round_up(_cdiv(M, 2), 8)   # guarantee >= 2 row blocks
        prefs = [min(512, cap), min(256, cap)]
    else:
        prefs = [1024, 512, 256]
    out = []
    for c in prefs:
        c = max(8, (c // 8) * 8)
        # Skip candidates that would create > ~25% row-padding waste.
        if _round_up(M, c) > (M8 * 5) // 4 + 8:
            continue
        if c not in out:
            out.append(c)
    if not out:
        out = [max(8, _round_up(_cdiv(M, 2), 8) if is_v7x else M8)]
    return out


def _ff_tile_candidates(d_ff):
    cands = [d_ff]
    for c in (8192, 4096, 2048, 1024, 512, 256, 128):
        if c < d_ff and d_ff % c == 0:
            cands.append(c)
    return cands  # descending


def _est_resident(tm, tf, nk, d_model, d_ff, x_it, w_it):
    return (2 * tm * d_model * x_it            # x tile, double-buffered
            + 2 * tm * d_model * x_it          # out tile, double-buffered
            + 2 * d_model * d_ff * w_it        # W1^T full (2 buffers, fetched once)
            + 2 * d_ff * d_model * w_it        # W2^T full (2 buffers, fetched once)
            + tm * tf * (4 + w_it)             # f32 GELU intermediate + cast copy
            + (tm * d_model * 4 if nk > 1 else 0))   # f32 accumulator scratch


def _est_stream(tm, tf, d_model, x_it, w_it):
    return (2 * tm * d_model * x_it            # x tile, double-buffered
            + 2 * tm * d_model * x_it          # out tile, double-buffered
            + 2 * d_model * tf * w_it          # W1^T column block, double-buffered
            + 2 * tf * d_model * w_it          # W2^T row block, double-buffered
            + tm * tf * (4 + w_it)             # f32 GELU intermediate + cast copy
            + tm * d_model * 4)                # f32 accumulator scratch


def _select_config(M, d_model, d_ff, x_it, w_it, budget, is_v7x):
    tm_cands = _row_tile_candidates(M, is_v7x)
    tf_cands = _ff_tile_candidates(d_ff)

    # 1) Weight-resident path: weights read from HBM exactly once (biggest win).
    for tm in tm_cands:
        for tf in tf_cands:
            nk = d_ff // tf
            if nk > 32:                      # keep the static in-kernel chunk loop small
                continue
            est = _est_resident(tm, tf, nk, d_model, d_ff, x_it, w_it)
            if est + _SCRATCH_MARGIN <= budget:
                return "resident", tm, tf, nk, est

    # 2) Streaming path: d_ff tiled on the grid (weights re-fetched per row tile).
    for tm in tm_cands:
        for tf in tf_cands:
            est = _est_stream(tm, tf, d_model, x_it, w_it)
            if est + _SCRATCH_MARGIN <= budget:
                return "stream", tm, tf, d_ff // tf, est

    # 3) Last resort: smallest tiles even if the estimate overshoots the budget.
    tm, tf = tm_cands[-1], tf_cands[-1]
    return "stream", tm, tf, d_ff // tf, _est_stream(tm, tf, d_model, x_it, w_it)


# -----------------------------------------------------------------------------------
# Public entry point
# -----------------------------------------------------------------------------------
@jax.jit
def ffn_pallas(x, w1_t, w2_t):
    """out = GELU(x @ w1_t) @ w2_t.

    x    : (B, S, d_model)
    w1_t : (d_model, d_ff)   == w1.weight.T   (PyTorch Linear stores (out, in))
    w2_t : (d_ff, d_model)   == w2.weight.T

    Inputs are fed to the MXU in their native dtype with f32 accumulation; pass bf16
    inputs for maximum MXU throughput.
    """
    B, S, d_model = x.shape
    d_ff = w1_t.shape[1]
    assert w1_t.shape == (d_model, d_ff)
    assert w2_t.shape == (d_ff, d_model)
    M = B * S

    cap, budget, is_v7x = _vmem_budget()
    x_it = x.dtype.itemsize
    w_it = w1_t.dtype.itemsize

    path, tm, tf, nk, est = _select_config(M, d_model, d_ff, x_it, w_it, budget, is_v7x)

    M_pad = _round_up(M, tm)
    x2d = x.reshape(M, d_model)
    if M_pad != M:
        x2d = jnp.pad(x2d, ((0, M_pad - M), (0, 0)))

    n_row_blocks = M_pad // tm
    weight_bytes = w1_t.size * w1_t.dtype.itemsize + w2_t.size * w2_t.dtype.itemsize
    cost = pl.CostEstimate(
        flops=4 * M_pad * d_model * d_ff,            # two matmuls
        transcendentals=M_pad * d_ff,                # erf in GELU
        bytes_accessed=(x2d.size * x_it
                        + weight_bytes * (1 if path == "resident" else n_row_blocks)
                        + M_pad * d_model * x_it),
    )
    vmem_limit = int(min(cap, max(est + _SCRATCH_MARGIN, 32 * _MiB)))

    if path == "resident":
        kernel = functools.partial(_ffn_resident_kernel, tf=tf, nk=nk)
        grid = (n_row_blocks,)
        in_specs = [
            pl.BlockSpec((tm, d_model), lambda i: (i, 0)),      # x row tile
            pl.BlockSpec((d_model, d_ff), lambda i: (0, 0)),    # W1^T, fetched once
            pl.BlockSpec((d_ff, d_model), lambda i: (0, 0)),    # W2^T, fetched once
        ]
        out_specs = pl.BlockSpec((tm, d_model), lambda i: (i, 0))
        scratch = [pltpu.VMEM((tm, d_model), jnp.float32)] if nk > 1 else []
        dims = ("parallel",)
    else:
        kernel = _ffn_stream_kernel
        grid = (n_row_blocks, nk)                               # reduction axis last
        in_specs = [
            pl.BlockSpec((tm, d_model), lambda i, k: (i, 0)),   # x row tile
            pl.BlockSpec((d_model, tf), lambda i, k: (0, k)),   # W1^T column block
            pl.BlockSpec((tf, d_model), lambda i, k: (k, 0)),   # W2^T row block
        ]
        out_specs = pl.BlockSpec((tm, d_model), lambda i, k: (i, 0))
        scratch = [pltpu.VMEM((tm, d_model), jnp.float32)]
        dims = ("parallel", "arbitrary")

    out2d = pl.pallas_call(
        kernel,
        out_shape=jax.ShapeDtypeStruct((M_pad, d_model), x.dtype),
        grid_spec=pltpu.PrefetchScalarGridSpec(
            num_scalar_prefetch=0,
            grid=grid,
            in_specs=in_specs,
            out_specs=out_specs,
            scratch_shapes=scratch,
        ),
        compiler_params=pltpu.CompilerParams(
            dimension_semantics=dims,
            vmem_limit_bytes=vmem_limit,
        ),
        cost_estimate=cost,
    )(x2d, w1_t, w2_t)

    if M_pad != M:
        out2d = out2d[:M]
    return out2d.reshape(B, S, d_model)


def ffn_reference(x, w1_t, w2_t):
    # Pure-JAX reference: w2(GELU(w1(x))) with exact (erf) GELU, full-precision matmuls.
    h = jnp.einsum("bsd,df->bsf", x, w1_t, precision=jax.lax.Precision.HIGHEST)
    h = jax.nn.gelu(h, approximate=False)
    return jnp.einsum("bsf,fd->bsd", h, w2_t, precision=jax.lax.Precision.HIGHEST)


if __name__ == "__main__":
    # Small shapes consistent with the module: batch=2, seq=8, d_model=32, d_ff=64.
    B, S, d_model, d_ff = 2, 8, 32, 64

    key = jax.random.PRNGKey(0)
    kx, k1, k2 = jax.random.split(key, 3)

    x = jax.random.normal(kx, (B, S, d_model), dtype=jnp.float32)

    # PyTorch nn.Linear stores weights as (out, in); pass them transposed as (in, out)
    # so the kernel matmuls directly: out = GELU(x @ W1^T) @ W2^T.
    w1 = jax.random.normal(k1, (d_ff, d_model), dtype=jnp.float32) * 0.05   # w1.weight
    w2 = jax.random.normal(k2, (d_model, d_ff), dtype=jnp.float32) * 0.05   # w2.weight
    w1_t = w1.T  # (d_model, d_ff)
    w2_t = w2.T  # (d_ff, d_model)

    out = ffn_pallas(x, w1_t, w2_t)
    jax.block_until_ready(out)
    assert out.shape == (B, S, d_model)

    # Tolerance accommodates MXU bf16-pass vs full-f32 matmul precision differences
    # between the Pallas kernel and the XLA reference; structural bugs would produce
    # errors on the order of the output magnitude itself.
    ref = ffn_reference(x, w1_t, w2_t)
    assert jnp.allclose(out, ref, atol=2e-2, rtol=2e-2), "mismatch vs reference"

    # Ragged row count (B*S not a multiple of 8) exercises the zero-padding path.
    xr = jax.random.normal(kx, (2, 13, d_model), dtype=jnp.float32)
    out_r = ffn_pallas(xr, w1_t, w2_t)
    jax.block_until_ready(out_r)
    assert out_r.shape == (2, 13, d_model)
    assert jnp.allclose(out_r, ffn_reference(xr, w1_t, w2_t), atol=2e-2, rtol=2e-2), \
        "mismatch vs reference (ragged)"

    print("KERNEL_OK")
</pallas_src>

<mosaic_0001>
module attributes {stable_mosaic.version = 11 : i64} {
  func.func @_ffn_resident_kernel(%arg0: i32, %arg1: memref<16x32xf32, #tpu.memory_space<vmem>>, %arg2: memref<32x64xf32, #tpu.memory_space<vmem>>, %arg3: memref<64x32xf32, #tpu.memory_space<vmem>>, %arg4: memref<16x32xf32, #tpu.memory_space<vmem>>) attributes {dimension_semantics = [#tpu.dimension_semantics<parallel>], iteration_bounds = array<i64: 1>, scalar_prefetch = 0 : i64, scratch_operands = 0 : i64, tpu.core_type = #tpu.core_type<tc>, window_params = [{transform_indices = @transform_0, window_bounds = array<i64: 16, 32>}, {pipeline_mode = #tpu.pipeline_mode<synchronous>, transform_indices = @transform_1, window_bounds = array<i64: 32, 64>}, {pipeline_mode = #tpu.pipeline_mode<synchronous>, transform_indices = @transform_2, window_bounds = array<i64: 64, 32>}, {transform_indices = @transform_3, window_bounds = array<i64: 16, 32>}]} {
    %c0 = arith.constant 0 : index
    %c0_0 = arith.constant 0 : index
    %0 = vector.load %arg1[%c0, %c0_0] : memref<16x32xf32, #tpu.memory_space<vmem>>, vector<16x32xf32>
    %c0_1 = arith.constant 0 : index
    %c0_2 = arith.constant 0 : index
    %1 = vector.load %arg2[%c0_1, %c0_2] : memref<32x64xf32, #tpu.memory_space<vmem>>, vector<32x64xf32>
    %cst = arith.constant dense<0.000000e+00> : vector<16x64xf32>
    %2 = tpu.matmul %0, %1, %cst {dimension_numbers = #tpu.dot_dimension_numbers<[1], [0], [0], [1], [0, 0, 1, 1], [], []>} : vector<16x32xf32>, vector<32x64xf32>, vector<16x64xf32> -> vector<16x64xf32>
    %cst_3 = arith.constant 5.000000e-01 : f32
    %3 = vector.broadcast %cst_3 : f32 to vector<16x64xf32>
    %4 = arith.mulf %3, %2 : vector<16x64xf32>
    %cst_4 = arith.constant 0.707106769 : f32
    %5 = vector.broadcast %cst_4 : f32 to vector<16x64xf32>
    %6 = arith.mulf %2, %5 : vector<16x64xf32>
    %7 = math.erf %6 : vector<16x64xf32>
    %cst_5 = arith.constant 1.000000e+00 : f32
    %8 = vector.broadcast %cst_5 : f32 to vector<16x64xf32>
    %9 = arith.addf %8, %7 : vector<16x64xf32>
    %10 = arith.mulf %4, %9 : vector<16x64xf32>
    %c0_6 = arith.constant 0 : index
    %c0_7 = arith.constant 0 : index
    %11 = vector.load %arg3[%c0_6, %c0_7] : memref<64x32xf32, #tpu.memory_space<vmem>>, vector<64x32xf32>
    %cst_8 = arith.constant dense<0.000000e+00> : vector<16x32xf32>
    %12 = tpu.matmul %10, %11, %cst_8 {dimension_numbers = #tpu.dot_dimension_numbers<[1], [0], [0], [1], [0, 0, 1, 1], [], []>} : vector<16x64xf32>, vector<64x32xf32>, vector<16x32xf32> -> vector<16x32xf32>
    %c0_9 = arith.constant 0 : index
    %c0_10 = arith.constant 0 : index
    %13 = vector.load %arg4[%c0_9, %c0_10] : memref<16x32xf32, #tpu.memory_space<vmem>>, vector<16x32xf32>
    tpu.vector_store %arg4[%c0_9, %c0_10], %12 {strides = array<i32>} : memref<16x32xf32, #tpu.memory_space<vmem>>, vector<16x32xf32>,
    return
  }
  func.func @transform_0(%arg0: i32) -> (i32, i32) {
    %c0_i32 = arith.constant 0 : i32
    %c0_i32_0 = arith.constant 0 : i32
    return %arg0, %c0_i32 : i32, i32
  }
  func.func @transform_1(%arg0: i32) -> (i32, i32) {
    %c0_i32 = arith.constant 0 : i32
    %c0_i32_0 = arith.constant 0 : i32
    %c0_i32_1 = arith.constant 0 : i32
    return %c0_i32, %c0_i32_0 : i32, i32
  }
  func.func @transform_2(%arg0: i32) -> (i32, i32) {
    %c0_i32 = arith.constant 0 : i32
    %c0_i32_0 = arith.constant 0 : i32
    %c0_i32_1 = arith.constant 0 : i32
    return %c0_i32, %c0_i32_0 : i32, i32
  }
  func.func @transform_3(%arg0: i32) -> (i32, i32) {
    %c0_i32 = arith.constant 0 : i32
    %c0_i32_0 = arith.constant 0 : i32
    return %arg0, %c0_i32 : i32, i32
  }
}

</mosaic_0001>

<llo_original>
// kernel: ffn_pallas.1
$region0: #{ffn_pallas.1}
  #allocation0 [shape = 'u32[]', space=smem, size = 0x4, offset = 0x4, fixed_abs, tag = 'smem constant byte address 0x4 - core index']
  #allocation1 [shape = 'u32[144,128]{1,0:T(1,128)}', space=vmem, size = 0x12000, scoped, tag = 'internal scratch']
  %s0 = inlined_call_operand.vmem [shape: f32[16,32], index: 0, kind: input, shape index: {}]
  %s1 = inlined_call_operand.vmem [shape: f32[32,64], index: 1, kind: input, shape index: {}]
  %s2 = inlined_call_operand.vmem [shape: f32[64,32], index: 2, kind: input, shape index: {}]
  %s3 = inlined_call_operand.hbm [shape: f32[16,32], index: 3, kind: output, shape index: {}]
  %s4 = sld [smem:[#allocation0]]
  $region22: #{ffn_pallas.1} parent=0
    _
  %s6 = ssub.s32 1, %s4
  %s7 = scalar_select 0, %s6, %s4
  $region1: #{ffn_pallas.1} parent=0
    #allocation2 [shape = 'u8[8192]{0}', space=vmem, size = 0x2000, scoped, tag = 'output window, operand 0, single buffered']
    #allocation3 [shape = 's32[1]{0}', space=sflag, size = 0x4, scoped, tag = 'scoped memory for ffn_pallas.1']
    %8 = vsyncpa [#allocation3], 0
    // Predicated region
    $region2: #{ffn_pallas.1} parent=1 // pred_check
      _
    $region3: #{ffn_pallas.1} parent=1 // pred_check_branch
      %10 = sbr.rel (0) target = $region5
    $region4: #{ffn_pallas.1} parent=1 // pred_region
      _
    $region5: #{ffn_pallas.1} parent=1 // pred_fallthru
      _
    // Predicated region
    $region6: #{ffn_pallas.1} parent=1 // pred_check
      _
    $region7: #{ffn_pallas.1} parent=1 // pred_check_branch
      %12 = sbr.rel (0) target = $region9
    $region8: #{ffn_pallas.1} parent=1 // pred_region
      _
    $region9: #{ffn_pallas.1} parent=1 // pred_fallthru
      _
    // Predicated region
    $region10: #{ffn_pallas.1} parent=1 // pred_check
      _
    $region11: #{ffn_pallas.1} parent=1 // pred_check_branch
      %14 = sbr.rel (0) target = $region13
    $region12: #{ffn_pallas.1} parent=1 // pred_region
      _
    $region13: #{ffn_pallas.1} parent=1 // pred_fallthru
      _
    %v15 = vld [vmem:[%s0] sm:$0xff]
    %v16 = vld [vmem:[%s0 + $0x8] sm:$0xff]
    %v17 = vld [vmem:[%s1] sm:$0xff]
    %v18 = vld [vmem:[%s1 + $0x8] sm:$0xff]
    %v19 = vld [vmem:[%s1 + $0x10] sm:$0xff]
    %v20 = vld [vmem:[%s1 + $0x18] sm:$0xff]
    %vm21 = vcmask 261120
    %v23 = vsel %vm21, %v15, 0
    %v26 = vsel %vm21, %v16, 0
    %28 = vmatprep.subr.mxu0 0.0
    %29 = vmatpush1.msra.mxu0 %v17
    %30 = vmatprep.subr.mxu0 0.0
    %31 = vmatpush1.msra.mxu0 %v18
    %32 = vmatprep.subr.mxu0 0.0
    %33 = vmatpush1.msra.mxu0 %v19
    %34 = vmatprep.subr.mxu0 0.0
    %35 = vmatpush1.msra.mxu0 %v20
    %36 = vmatprep.subr.mxu0 0.0
    %37 = vmatpush1.msra.mxu0 0.0
    %38 = vmatprep.subr.mxu0 0.0
    %39 = vmatpush1.msra.mxu0 0.0
    %40 = vmatprep.subr.mxu0 0.0
    %41 = vmatpush1.msra.mxu0 0.0
    %42 = vmatprep.subr.mxu0 0.0
    %43 = vmatpush1.msra.mxu0 0.0
    %44 = vmatprep.subr.mxu0 0.0
    %45 = vmatpush1.msra.mxu0 0.0
    %46 = vmatprep.subr.mxu0 0.0
    %47 = vmatpush1.msra.mxu0 0.0
    %48 = vmatprep.subr.mxu0 0.0
    %49 = vmatpush1.msra.mxu0 0.0
    %50 = vmatprep.subr.mxu0 0.0
    %51 = vmatpush1.msra.mxu0 0.0
    %52 = vmatprep.subr.mxu0 0.0
    %53 = vmatpush1.msra.mxu0 0.0
    %54 = vmatprep.subr.mxu0 0.0
    %55 = vmatpush1.msra.mxu0 0.0
    %56 = vmatprep.subr.mxu0 0.0
    %57 = vmatpush1.msra.mxu0 0.0
    %58 = vmatprep.subr.mxu0 0.0
    %59 = vmatpush1.msra.mxu0 0.0
    %60 = vmatprep.subr.mxu0 0.0
    %61 = vmatpush1.msra.mxu0 0.0
    %62 = vmatprep.subr.mxu0 0.0
    %63 = vmatpush1.msra.mxu0 0.0
    %64 = vmatprep.subr.mxu0 0.0
    %65 = vmatpush1.msra.mxu0 0.0
    %66 = vmatprep.subr.mxu0 0.0
    %67 = vmatpush1.msra.mxu0 0.0
    %68 = vmatprep.subr.mxu0 0.0
    %69 = vmatpush1.msra.mxu0 0.0
    %70 = vmatprep.subr.mxu0 0.0
    %71 = vmatpush1.msra.mxu0 0.0
    %72 = vmatprep.subr.mxu0 0.0
    %73 = vmatpush1.msra.mxu0 0.0
    %74 = vmatprep.subr.mxu0 0.0
    %75 = vmatpush1.msra.mxu0 0.0
    %76 = vmatprep.subr.mxu0 0.0
    %77 = vmatpush1.msra.mxu0 0.0
    %78 = vmatprep.subr.mxu0 0.0
    %79 = vmatpush1.msra.mxu0 0.0
    %80 = vmatprep.subr.mxu0 0.0
    %81 = vmatpush1.msra.mxu0 0.0
    %82 = vmatprep.subr.mxu0 0.0
    %83 = vmatpush1.msra.mxu0 0.0
    %84 = vmatprep.subr.mxu0 0.0
    %85 = vmatpush1.msra.mxu0 0.0
    %86 = vmatprep.subr.mxu0 0.0
    %87 = vmatpush1.msra.mxu0 0.0
    %88 = vmatprep.subr.mxu0 0.0
    %89 = vmatpush1.msra.mxu0 0.0
    %90 = vmatprep.subr.mxu0 0.0
    %91 = vmatpush1.msra.mxu0 0.0
    %92 = vmatprep.mubr.f32.mxu0 0.0
    %93 = vmatmul.mubr.f32.gmra.mrb[0].mxu0 %v23
    %v94 = vpop.f32.mrb[0].mxu0
    %v95 = vadd.f32 0.0, %v94
    %v96 = vpop.f32.mrb[0].mxu0
    %97 = vmatprep.mubr.f32.mxu0 0.0
    %98 = vmatmul.mubr.f32.gmra.mrb[0].mxu0 %v26
    %v99 = vpop.f32.mrb[0].mxu0
    %v100 = vadd.f32 0.0, %v99
    %v101 = vpop.f32.mrb[0].mxu0
    %102 = vdwg.mxu0
    %v103 = vmul.f32 %v95, 0.5
    %v104 = vmul.f32 %v100, 0.5
    %v105 = vmul.f32 %v95, 0.70710677
    %v106 = vmul.f32 %v100, 0.70710677
    %v107 = verf.f32.pop %v105
    %v108 = verf.f32.pop %v106
    %v109 = vadd.f32 %v107, 1.0
    %v110 = vadd.f32 %v108, 1.0
    %v111 = vmul.f32 %v103, %v109
    %v112 = vmul.f32 %v104, %v110
    %v113 = vld [vmem:[%s2] sm:$0xff]
    %v114 = vld [vmem:[%s2 + $0x8] sm:$0xff]
    %v115 = vld [vmem:[%s2 + $0x10] sm:$0xff]
    %v116 = vld [vmem:[%s2 + $0x18] sm:$0xff]
    %v117 = vld [vmem:[%s2 + $0x20] sm:$0xff]
    %v118 = vld [vmem:[%s2 + $0x28] sm:$0xff]
    %v119 = vld [vmem:[%s2 + $0x30] sm:$0xff]
    %v120 = vld [vmem:[%s2 + $0x38] sm:$0xff]
    %vm121 = vcmask 523264
    %v123 = vsel %vm121, %v111, 0
    %v126 = vsel %vm121, %v112, 0
    %128 = vmatprep.subr.mxu0 0.0
    %129 = vmatpush1.msra.mxu0 %v113
    %130 = vmatprep.subr.mxu0 0.0
    %131 = vmatpush1.msra.mxu0 %v114
    %132 = vmatprep.subr.mxu0 0.0
    %133 = vmatpush1.msra.mxu0 %v115
    %134 = vmatprep.subr.mxu0 0.0
    %135 = vmatpush1.msra.mxu0 %v116
    %136 = vmatprep.subr.mxu0 0.0
    %137 = vmatpush1.msra.mxu0 %v117
    %138 = vmatprep.subr.mxu0 0.0
    %139 = vmatpush1.msra.mxu0 %v118
    %140 = vmatprep.subr.mxu0 0.0
    %141 = vmatpush1.msra.mxu0 %v119
    %142 = vmatprep.subr.mxu0 0.0
    %143 = vmatpush1.msra.mxu0 %v120
    %144 = vmatprep.subr.mxu0 0.0
    %145 = vmatpush1.msra.mxu0 0.0
    %146 = vmatprep.subr.mxu0 0.0
    %147 = vmatpush1.msra.mxu0 0.0
    %148 = vmatprep.subr.mxu0 0.0
    %149 = vmatpush1.msra.mxu0 0.0
    %150 = vmatprep.subr.mxu0 0.0
    %151 = vmatpush1.msra.mxu0 0.0
    %152 = vmatprep.subr.mxu0 0.0
    %153 = vmatpush1.msra.mxu0 0.0
    %154 = vmatprep.subr.mxu0 0.0
    %155 = vmatpush1.msra.mxu0 0.0
    %156 = vmatprep.subr.mxu0 0.0
    %157 = vmatpush1.msra.mxu0 0.0
    %158 = vmatprep.subr.mxu0 0.0
    %159 = vmatpush1.msra.mxu0 0.0
    %160 = vmatprep.subr.mxu0 0.0
    %161 = vmatpush1.msra.mxu0 0.0
    %162 = vmatprep.subr.mxu0 0.0
    %163 = vmatpush1.msra.mxu0 0.0
    %164 = vmatprep.subr.mxu0 0.0
    %165 = vmatpush1.msra.mxu0 0.0
    %166 = vmatprep.subr.mxu0 0.0
    %167 = vmatpush1.msra.mxu0 0.0
    %168 = vmatprep.subr.mxu0 0.0
    %169 = vmatpush1.msra.mxu0 0.0
    %170 = vmatprep.subr.mxu0 0.0
    %171 = vmatpush1.msra.mxu0 0.0
    %172 = vmatprep.subr.mxu0 0.0
    %173 = vmatpush1.msra.mxu0 0.0
    %174 = vmatprep.subr.mxu0 0.0
    %175 = vmatpush1.msra.mxu0 0.0
    %176 = vmatprep.subr.mxu0 0.0
    %177 = vmatpush1.msra.mxu0 0.0
    %178 = vmatprep.subr.mxu0 0.0
    %179 = vmatpush1.msra.mxu0 0.0
    %180 = vmatprep.subr.mxu0 0.0
    %181 = vmatpush1.msra.mxu0 0.0
    %182 = vmatprep.subr.mxu0 0.0
    %183 = vmatpush1.msra.mxu0 0.0
    %184 = vmatprep.subr.mxu0 0.0
    %185 = vmatpush1.msra.mxu0 0.0
    %186 = vmatprep.subr.mxu0 0.0
    %187 = vmatpush1.msra.mxu0 0.0
    %188 = vmatprep.subr.mxu0 0.0
    %189 = vmatpush1.msra.mxu0 0.0
    %190 = vmatprep.subr.mxu0 0.0
    %191 = vmatpush1.msra.mxu0 0.0
    %192 = vmatprep.mubr.f32.mxu0 0.0
    %193 = vmatmul.mubr.f32.gmra.mrb[0].mxu0 %v123
    %v194 = vpop.f32.mrb[0].mxu0
    %v195 = vadd.f32 0.0, %v194
    %v196 = vpop.f32.mrb[0].mxu0
    %197 = vmatprep.mubr.f32.mxu0 0.0
    %198 = vmatmul.mubr.f32.gmra.mrb[0].mxu0 %v126
    %v199 = vpop.f32.mrb[0].mxu0
    %v200 = vadd.f32 0.0, %v199
    %v201 = vpop.f32.mrb[0].mxu0
    %202 = vdwg.mxu0
    %203 = vst.msk [vmem:[#allocation2] sm:$0xff] %vm21, %v195
    %204 = vst.msk [vmem:[#allocation2 + $0x8] sm:$0xff] %vm21, %v200
    // Predicated region
    $region14: #{ffn_pallas.1} parent=1 // pred_check
      _
    $region15: #{ffn_pallas.1} parent=1 // pred_check_branch
      %206 = sbr.rel (0) target = $region17
    $region16: #{ffn_pallas.1} parent=1 // pred_region
      %s208 = ssub.s32 256, 256
      %209 = vsyncadd [#allocation3], %s208
      %s210 = sshll.u32 [#allocation2], 4
      %s211 = int_to_ptr.vmem [resolvable:$true] %s210
      %216 = dma.vmem_to_hbm [thread:$0]  %s211, 256, %s3, [#allocation3], 128, 128, 8
    $region17: #{ffn_pallas.1} parent=1 // pred_fallthru
      _
    // Predicated region
    $region18: #{ffn_pallas.1} parent=1 // pred_check
      _
    $region19: #{ffn_pallas.1} parent=1 // pred_check_branch
      %218 = sbr.rel (0) target = $region21
    $region20: #{ffn_pallas.1} parent=1 // pred_region
      %219 = dma.done [#allocation3], 256
    $region21: #{ffn_pallas.1} parent=1 // pred_fallthru
      _
    %220 = vsyncpa [#allocation3], 1

</llo_original>
